<compile_context>
chip_gen: v5e
topology: v5e:2x2
jax: 0.10.0
libtpu: 0.0.40
codegen_flags: <defaults>
</compile_context>

<pallas_src>
import functools

import jax
import jax.numpy as jnp
import numpy as np
from jax.experimental import pallas as pl
from jax.experimental.pallas import tpu as pltpu


MAX_REL = 2                 # self.max_relative_position
NUM_REL = 2 * MAX_REL + 1   # 5 distinct relative-position rows


# ----------------------------- Linear projection -----------------------------

def _linear_kernel(x_ref, wt_ref, b_ref, o_ref, *, compute_dtype):
    # x: [TN, Din];  wt: [Din, Dout] already in compute_dtype (pre-cast in wrapper);
    # b: [1, Dout] f32.  Only the streamed activation tile is cast here.
    x = x_ref[...].astype(compute_dtype)
    o_ref[...] = (
        jnp.dot(x, wt_ref[...], preferred_element_type=jnp.float32) + b_ref[...]
    ).astype(o_ref.dtype)


def _row_tiling(n):
    """Pick a row tile and the padded row count.

    Small inputs (<=256 rows) use a single block (nothing to pipeline); larger
    inputs always keep a 512/256-row pipelined tile by padding the rows, instead
    of collapsing to one giant block (old fallback)."""
    if n <= 256:
        return n, n
    for t in (512, 256):
        if n % t == 0:
            return t, n
    t = 256
    return t, ((n + t - 1) // t) * t


def linear(x2d, w, b, *, compute_dtype=jnp.float32):
    """x2d: [N, Din];  w: [Dout, Din] (torch nn.Linear layout);  b: [Dout]."""
    n, din = x2d.shape
    dout = w.shape[0]

    # Pre-cast + pre-transpose ONCE in the wrapper: the weight block is resident
    # (constant index_map), so casting it inside the kernel would redo the convert
    # every grid step and double its HBM->VMEM bytes.
    wt = jnp.transpose(w).astype(compute_dtype)       # [Din, Dout]
    b2 = b.reshape(1, dout).astype(jnp.float32)

    tn, n_pad = _row_tiling(n)
    x_in = x2d if n_pad == n else jnp.pad(x2d, ((0, n_pad - n), (0, 0)))

    x_itm = jnp.dtype(x2d.dtype).itemsize
    w_itm = jnp.dtype(compute_dtype).itemsize
    # double-buffered activation/output blocks + (conservatively 2x) resident weight
    vmem_need = 2 * tn * (din + dout) * x_itm + 2 * din * dout * w_itm + dout * 4
    cp_kwargs = {}
    if vmem_need > 30 * (1 << 20):
        cp_kwargs["vmem_limit_bytes"] = int(min(vmem_need * 5 // 4, 64 * (1 << 20)))

    cost = pl.CostEstimate(
        flops=2 * n_pad * din * dout,
        transcendentals=0,
        bytes_accessed=(n_pad * din + n_pad * dout) * x_itm + din * dout * w_itm,
    )

    out = pl.pallas_call(
        functools.partial(_linear_kernel, compute_dtype=compute_dtype),
        out_shape=jax.ShapeDtypeStruct((n_pad, dout), x2d.dtype),
        grid_spec=pltpu.PrefetchScalarGridSpec(
            num_scalar_prefetch=0,
            grid=(n_pad // tn,),
            in_specs=[
                pl.BlockSpec((tn, din), lambda i: (i, 0)),
                pl.BlockSpec((din, dout), lambda i: (0, 0)),   # weight stays resident
                pl.BlockSpec((1, dout), lambda i: (0, 0)),
            ],
            out_specs=pl.BlockSpec((tn, dout), lambda i: (i, 0)),
        ),
        compiler_params=pltpu.CompilerParams(
            dimension_semantics=("parallel",), **cp_kwargs),
        cost_estimate=cost,
    )(x_in, wt, b2)
    return out if n_pad == n else out[:n]


# ----------------------------- Attention core --------------------------------

def _attn_kernel(q_ref, k_ref, v_ref, rk_ref, rv_ref, o_ref, *,
                 n_heads, head_dim, scale, compute_dtype):
    bt = q_ref.shape[0]          # batch elements per grid step
    tq = q_ref.shape[1]          # query rows per grid step
    lk = k_ref.shape[1]

    rk = rk_ref[...]             # [NUM_REL, hd], already compute_dtype (pre-cast)
    rv = rv_ref[...]             # [NUM_REL, hd], f32 (tiny dot kept in f32)

    # Clipped relative-distance bucket masks: computed ONCE per grid step and shared
    # by every batch element / head (hoisted out of the head loop).  Never materializes
    # the [Lq, Lk, head_dim] tensor of the reference module.
    q0 = pl.program_id(1) * tq   # absolute query offset when Lq is tiled
    row = jax.lax.broadcasted_iota(jnp.int32, (tq, lk), 0) + q0
    col = jax.lax.broadcasted_iota(jnp.int32, (tq, lk), 1)
    dist = jnp.clip(col - row, -MAX_REL, MAX_REL) + MAX_REL      # values in [0, NUM_REL)
    maskf = [(dist == r).astype(jnp.float32) for r in range(NUM_REL)]

    # NOTE: the PyTorch module DIVIDES by scale = head_dim**-0.5 (i.e. multiplies by
    # sqrt(head_dim)); reproduced verbatim.
    inv_scale = jnp.float32(1.0 / scale)

    for b in range(bt):                   # static, small (Bt picked in wrapper)
        head_outs = []
        for h in range(n_heads):          # static unroll; each head ends in a store-feeding value
            lo = h * head_dim
            hi = lo + head_dim
            q = q_ref[b, :, lo:hi].astype(compute_dtype)   # [tq, hd]
            k = k_ref[b, :, lo:hi].astype(compute_dtype)   # [lk, hd]
            v = v_ref[b, :, lo:hi].astype(compute_dtype)   # [lk, hd]

            # content-content scores: contract last dims (no explicit k transpose)
            s = jax.lax.dot_general(
                q, k, (((1,), (1,)), ((), ())),
                preferred_element_type=jnp.float32)                     # [tq, lk]

            # content-position scores: q @ rel_k_table^T -> [tq, 5], spread via masks
            qrk = jax.lax.dot_general(
                q, rk, (((1,), (1,)), ((), ())),
                preferred_element_type=jnp.float32)                     # [tq, NUM_REL]
            for r in range(NUM_REL):
                s = s + qrk[:, r:r + 1] * maskf[r]

            logits = s * inv_scale
            logits = logits - jnp.max(logits, axis=-1, keepdims=True)
            p = jnp.exp(logits)
            p = p * pl.reciprocal(jnp.sum(p, axis=-1, keepdims=True), approx=True)
            # dropout after softmax: identity at inference time.
            # TODO(synk): training-mode dropout not implemented (eval mode only).

            # content values on the MXU
            w = jnp.dot(p.astype(compute_dtype), v,
                        preferred_element_type=jnp.float32)             # [tq, hd]

            # position values: bucket probability masses [tq, 5] x rel_v table [5, hd]
            # — a single small MXU dot instead of 5 broadcast-mul-adds on the VALU.
            masses = jnp.concatenate(
                [jnp.sum(p * maskf[r], axis=-1, keepdims=True) for r in range(NUM_REL)],
                axis=-1)                                                # [tq, NUM_REL]
            w = w + jnp.dot(masses, rv, preferred_element_type=jnp.float32)

            head_outs.append(w)

        # One lane-dense store per batch element, directly in [B, Lq, hid_dim] layout
        # (heads merged here, so no transpose is needed before fc_o).
        o_ref[b] = jnp.concatenate(head_outs, axis=-1).astype(o_ref.dtype)


def _pick_batch_tile(B, lq, lk, d, n_heads):
    """Largest divisor of B whose per-step working set stays small; amortizes the
    per-grid-step overhead when L*D is small, without blowing up the head unroll."""
    budget = 2 * (1 << 20)  # ~2 MiB of per-step scores + activation blocks
    bt = 1
    for cand in range(1, B + 1):
        if B % cand:
            continue
        if cand * n_heads > 16:
            continue
        scores = cand * n_heads * lq * lk * 4
        blocks = cand * (2 * lq * d + 2 * lk * d) * 4
        if scores + blocks <= budget:
            bt = cand
    return bt


def _pick_q_tile(lq):
    """Tile Lq when it is a large 128-multiple (pipelining + bounded score footprint)."""
    if lq >= 256 and lq % 128 == 0:
        return 256 if lq % 256 == 0 else 128
    return lq


def attn_core(q, k, v, rel_k, rel_v, *, n_heads, head_dim, scale,
              compute_dtype=jnp.float32):
    """q/k/v: [B, L*, D];  rel tables: [NUM_REL, head_dim]  ->  [B, Lq, D]."""
    B, lq, D = q.shape
    lk = k.shape[1]
    lv = v.shape[1]

    bt = _pick_batch_tile(B, lq, lk, D, n_heads)
    tq = _pick_q_tile(lq)

    kernel = functools.partial(
        _attn_kernel, n_heads=n_heads, head_dim=head_dim, scale=scale,
        compute_dtype=compute_dtype)

    cost = pl.CostEstimate(
        flops=4 * B * n_heads * lq * lk * head_dim
              + 4 * B * n_heads * lq * NUM_REL * head_dim,
        transcendentals=B * n_heads * lq * lk,
        bytes_accessed=4 * (2 * B * lq * D + 2 * B * lk * D * max(1, lq // tq)),
    )

    return pl.pallas_call(
        kernel,
        out_shape=jax.ShapeDtypeStruct((B, lq, D), q.dtype),
        grid_spec=pltpu.PrefetchScalarGridSpec(
            num_scalar_prefetch=0,
            grid=(B // bt, lq // tq),
            in_specs=[
                pl.BlockSpec((bt, tq, D), lambda b, qi: (b, qi, 0)),
                pl.BlockSpec((bt, lk, D), lambda b, qi: (b, 0, 0)),
                pl.BlockSpec((bt, lv, D), lambda b, qi: (b, 0, 0)),
                pl.BlockSpec((NUM_REL, head_dim), lambda b, qi: (0, 0)),  # tables resident
                pl.BlockSpec((NUM_REL, head_dim), lambda b, qi: (0, 0)),
            ],
            out_specs=pl.BlockSpec((bt, tq, D), lambda b, qi: (b, qi, 0)),
        ),
        compiler_params=pltpu.CompilerParams(
            # both axes independent -> shards across TensorCores (v7x megacore)
            dimension_semantics=("parallel", "parallel"),
        ),
        cost_estimate=cost,
    )(q, k, v, rel_k, rel_v)


# ------------------------------ JAX glue ------------------------------------

def project_qkv(params, query, key, value, compute_dtype):
    B, lq, D = query.shape
    if (query is key) and (key is value):
        # Self-attention: fuse fc_q/fc_k/fc_v into one pallas_call ([D, 3D] weights,
        # 3x lane width on the projection matmul, one third the call overhead).
        w3 = jnp.concatenate([params["wq"], params["wk"], params["wv"]], axis=0)
        b3 = jnp.concatenate([params["bq"], params["bk"], params["bv"]], axis=0)
        qkv = linear(query.reshape(B * lq, D), w3, b3, compute_dtype=compute_dtype)
        qkv = qkv.reshape(B, lq, 3 * D)
        return qkv[..., :D], qkv[..., D:2 * D], qkv[..., 2 * D:]
    lk = key.shape[1]
    lv = value.shape[1]
    q = linear(query.reshape(B * lq, D), params["wq"], params["bq"],
               compute_dtype=compute_dtype).reshape(B, lq, D)
    k = linear(key.reshape(B * lk, D), params["wk"], params["bk"],
               compute_dtype=compute_dtype).reshape(B, lk, D)
    v = linear(value.reshape(B * lv, D), params["wv"], params["bv"],
               compute_dtype=compute_dtype).reshape(B, lv, D)
    return q, k, v


def multi_head_attention(params, query, key, value, n_heads, *,
                         compute_dtype=jnp.float32):
    B, lq, D = query.shape
    hd = D // n_heads
    scale = hd ** (-0.5)

    q, k, v = project_qkv(params, query, key, value, compute_dtype)

    # Pre-cast rel_k once in the wrapper (it feeds the MXU with q); rel_v stays f32
    # because its dot uses f32 probability masses and is tiny.
    rel_k = params["rel_k"].astype(compute_dtype)
    rel_v = params["rel_v"].astype(jnp.float32)

    # [B, Lq, D], heads already merged in the right layout for fc_o.
    x = attn_core(q, k, v, rel_k, rel_v,
                  n_heads=n_heads, head_dim=hd, scale=scale,
                  compute_dtype=compute_dtype)

    out = linear(x.reshape(B * lq, D), params["wo"], params["bo"],
                 compute_dtype=compute_dtype).reshape(B, lq, D)
    return out


# ------------------------------ Reference -----------------------------------

def relative_position(table, length_q, length_k):
    """RelativePosition.forward (used only by the pure-JAX reference)."""
    rq = jnp.arange(length_q)
    rk = jnp.arange(length_k)
    dist = rk[None, :] - rq[:, None]
    idx = jnp.clip(dist, -MAX_REL, MAX_REL) + MAX_REL
    return table[idx]  # [Lq, Lk, num_units]


def reference(params, query, key, value, n_heads):
    """Pure-JAX mirror of the PyTorch forward (mask=None, eval-mode dropout)."""
    B, Lq, D = query.shape
    Lk = key.shape[1]
    Lv = value.shape[1]
    hd = D // n_heads
    scale = hd ** (-0.5)

    q = query @ params["wq"].T + params["bq"]
    k = key @ params["wk"].T + params["bk"]
    v = value @ params["wv"].T + params["bv"]

    r_q1 = q.reshape(B, Lq, n_heads, hd).transpose(0, 2, 1, 3)
    r_k1 = k.reshape(B, Lk, n_heads, hd).transpose(0, 2, 1, 3)
    attn1 = jnp.einsum("bhqd,bhkd->bhqk", r_q1, r_k1)

    r_q2 = q.transpose(1, 0, 2).reshape(Lq, B * n_heads, hd)
    r_k2 = relative_position(params["rel_k"], Lq, Lk)
    attn2 = jnp.einsum("qnd,qkd->nqk", r_q2, r_k2).reshape(B, n_heads, Lq, Lk)

    attn = (attn1 + attn2) / scale
    attn = jax.nn.softmax(attn, axis=-1)

    r_v1 = v.reshape(B, Lv, n_heads, hd).transpose(0, 2, 1, 3)
    w1 = jnp.einsum("bhqk,bhkd->bhqd", attn, r_v1)
    r_v2 = relative_position(params["rel_v"], Lq, Lv)
    w2_in = attn.transpose(2, 0, 1, 3).reshape(Lq, B * n_heads, Lk)
    w2 = jnp.einsum("qnk,qkd->nqd", w2_in, r_v2).reshape(B, n_heads, Lq, hd)

    x = (w1 + w2).transpose(0, 2, 1, 3).reshape(B, Lq, D)
    return x @ params["wo"].T + params["bo"]


def init_params(key, hid_dim, n_heads):
    hd = hid_dim // n_heads
    ks = jax.random.split(key, 10)

    def lin_init(kw, kb, din, dout):
        bound = 1.0 / (din ** 0.5)
        w = jax.random.uniform(kw, (dout, din), jnp.float32, -bound, bound)
        b = jax.random.uniform(kb, (dout,), jnp.float32, -bound, bound)
        return w, b

    def xavier(kk, shape):
        bound = (6.0 / (shape[0] + shape[1])) ** 0.5
        return jax.random.uniform(kk, shape, jnp.float32, -bound, bound)

    wq, bq = lin_init(ks[0], ks[1], hid_dim, hid_dim)
    wk, bk = lin_init(ks[2], ks[3], hid_dim, hid_dim)
    wv, bv = lin_init(ks[4], ks[5], hid_dim, hid_dim)
    wo, bo = lin_init(ks[6], ks[7], hid_dim, hid_dim)
    rel_k = xavier(ks[8], (NUM_REL, hd))
    rel_v = xavier(ks[9], (NUM_REL, hd))
    return dict(wq=wq, bq=bq, wk=wk, bk=bk, wv=wv, bv=bv, wo=wo, bo=bo,
                rel_k=rel_k, rel_v=rel_v)


if __name__ == "__main__":
    B, L, hid_dim, n_heads = 2, 8, 32, 4

    root = jax.random.PRNGKey(0)
    kp, kq, kk, kv = jax.random.split(root, 4)
    params = init_params(kp, hid_dim, n_heads)
    query = jax.random.normal(kq, (B, L, hid_dim), jnp.float32)
    key = jax.random.normal(kk, (B, L, hid_dim), jnp.float32)
    value = jax.random.normal(kv, (B, L, hid_dim), jnp.float32)

    # Cross-attention path (separate q/k/v projections), f32 operands.
    out = jax.block_until_ready(
        multi_head_attention(params, query, key, value, n_heads))
    ref = jax.block_until_ready(reference(params, query, key, value, n_heads))
    np.testing.assert_allclose(np.asarray(out), np.asarray(ref), rtol=2e-2, atol=2e-2)

    # Self-attention path exercises the fused [D, 3D] QKV projection.
    out_self = jax.block_until_ready(
        multi_head_attention(params, query, query, query, n_heads))
    ref_self = jax.block_until_ready(reference(params, query, query, query, n_heads))
    np.testing.assert_allclose(np.asarray(out_self), np.asarray(ref_self),
                               rtol=2e-2, atol=2e-2)

    # bf16 MXU operands (v6e/v7x rate; keep default f32 on v5e), f32 accumulation
    # & softmax — loose tolerance.
    out_bf16 = jax.block_until_ready(
        multi_head_attention(params, query, key, value, n_heads,
                             compute_dtype=jnp.bfloat16))
    np.testing.assert_allclose(np.asarray(out_bf16), np.asarray(ref),
                               rtol=1e-1, atol=1e-1)

    print("KERNEL_OK")
</pallas_src>

<mosaic_0001>
module attributes {stable_mosaic.version = 11 : i64} {
  func.func @_linear_kernel(%arg0: i32, %arg1: memref<16x32xf32, #tpu.memory_space<vmem>>, %arg2: memref<32x32xf32, #tpu.memory_space<vmem>>, %arg3: memref<1x32xf32, #tpu.memory_space<vmem>>, %arg4: memref<16x32xf32, #tpu.memory_space<vmem>>) attributes {dimension_semantics = [#tpu.dimension_semantics<parallel>], iteration_bounds = array<i64: 1>, scalar_prefetch = 0 : i64, scratch_operands = 0 : i64, tpu.core_type = #tpu.core_type<tc>, window_params = [{transform_indices = @transform_0, window_bounds = array<i64: 16, 32>}, {pipeline_mode = #tpu.pipeline_mode<synchronous>, transform_indices = @transform_1, window_bounds = array<i64: 32, 32>}, {pipeline_mode = #tpu.pipeline_mode<synchronous>, transform_indices = @transform_2, window_bounds = array<i64: 1, 32>}, {transform_indices = @transform_3, window_bounds = array<i64: 16, 32>}]} {
    %c0 = arith.constant 0 : index
    %c0_0 = arith.constant 0 : index
    %0 = vector.load %arg1[%c0, %c0_0] : memref<16x32xf32, #tpu.memory_space<vmem>>, vector<16x32xf32>
    %c0_1 = arith.constant 0 : index
    %c0_2 = arith.constant 0 : index
    %1 = vector.load %arg2[%c0_1, %c0_2] : memref<32x32xf32, #tpu.memory_space<vmem>>, vector<32x32xf32>
    %cst = arith.constant dense<0.000000e+00> : vector<16x32xf32>
    %2 = tpu.matmul %0, %1, %cst {dimension_numbers = #tpu.dot_dimension_numbers<[1], [0], [0], [1], [0, 0, 1, 1], [], []>} : vector<16x32xf32>, vector<32x32xf32>, vector<16x32xf32> -> vector<16x32xf32>
    %c0_3 = arith.constant 0 : index
    %c0_4 = arith.constant 0 : index
    %3 = vector.load %arg3[%c0_3, %c0_4] : memref<1x32xf32, #tpu.memory_space<vmem>>, vector<1x32xf32>
    %4 = vector.broadcast %3 : vector<1x32xf32> to vector<16x32xf32>
    %5 = arith.addf %2, %4 : vector<16x32xf32>
    %c0_5 = arith.constant 0 : index
    %c0_6 = arith.constant 0 : index
    %6 = vector.load %arg4[%c0_5, %c0_6] : memref<16x32xf32, #tpu.memory_space<vmem>>, vector<16x32xf32>
    tpu.vector_store %arg4[%c0_5, %c0_6], %5 {strides = array<i32>} : memref<16x32xf32, #tpu.memory_space<vmem>>, vector<16x32xf32>,
    return
  }
  func.func @transform_0(%arg0: i32) -> (i32, i32) {
    %c0_i32 = arith.constant 0 : i32
    %c0_i32_0 = arith.constant 0 : i32
    return %arg0, %c0_i32 : i32, i32
  }
  func.func @transform_1(%arg0: i32) -> (i32, i32) {
    %c0_i32 = arith.constant 0 : i32
    %c0_i32_0 = arith.constant 0 : i32
    %c0_i32_1 = arith.constant 0 : i32
    return %c0_i32, %c0_i32_0 : i32, i32
  }
  func.func @transform_2(%arg0: i32) -> (i32, i32) {
    %c0_i32 = arith.constant 0 : i32
    %c0_i32_0 = arith.constant 0 : i32
    %c0_i32_1 = arith.constant 0 : i32
    return %c0_i32, %c0_i32_0 : i32, i32
  }
  func.func @transform_3(%arg0: i32) -> (i32, i32) {
    %c0_i32 = arith.constant 0 : i32
    %c0_i32_0 = arith.constant 0 : i32
    return %arg0, %c0_i32 : i32, i32
  }
}

</mosaic_0001>

<llo_original>
// kernel: tpu_custom_call.1
$region0: #{tpu_custom_call.1}
  #allocation0 [shape = 'u32[]', space=smem, size = 0x4, offset = 0x4, fixed_abs, tag = 'smem constant byte address 0x4 - core index']
  #allocation1 [shape = 'u32[72,128]{1,0:T(1,128)}', space=vmem, size = 0x9000, scoped, tag = 'internal scratch']
  %s0 = inlined_call_operand.hbm [shape: f32[16,32], index: 0, kind: input, shape index: {}]
  %s1 = inlined_call_operand.hbm [shape: f32[32,32], index: 1, kind: input, shape index: {}]
  %s2 = inlined_call_operand.vmem [shape: f32[1,32], index: 2, kind: input, shape index: {}]
  %s3 = inlined_call_operand.hbm [shape: f32[16,32], index: 3, kind: output, shape index: {}]
  %s4 = sld [smem:[#allocation0]]
  $region30: #{tpu_custom_call.1} parent=0
    _
  %s6 = ssub.s32 1, %s4
  %s7 = scalar_select 0, %s6, %s4
  $region1: #{tpu_custom_call.1} parent=0
    #allocation2 [shape = 'u8[8192]{0}', space=vmem, size = 0x2000, scoped, tag = 'input window, operand 0, single buffered']
    #allocation3 [shape = 's32[1]{0}', space=sflag, size = 0x4, scoped, tag = 'scoped memory for tpu_custom_call.1']
    #allocation4 [shape = 's32[1]{0}', space=sflag, size = 0x4, scoped, tag = 'scoped memory for tpu_custom_call.1']
    #allocation5 [shape = 'u8[16384]{0}', space=vmem, size = 0x4000, scoped, tag = 'input window, operand 1, single buffered']
    #allocation6 [shape = 's32[1]{0}', space=sflag, size = 0x4, scoped, tag = 'scoped memory for tpu_custom_call.1']
    #allocation7 [shape = 'u8[8192]{0}', space=vmem, size = 0x2000, scoped, tag = 'output window, operand 0, single buffered']
    %8 = vsyncpa [#allocation3], 0
    %9 = vsyncpa [#allocation6], 0
    %10 = vsyncpa [#allocation4], 0
    // Predicated region
    $region2: #{tpu_custom_call.1} parent=1 // pred_check
      _
    $region3: #{tpu_custom_call.1} parent=1 // pred_check_branch
      %12 = sbr.rel (0) target = $region5
    $region4: #{tpu_custom_call.1} parent=1 // pred_region
      %14 = vsyncadd [#allocation3], 0
      %s15 = sshll.u32 %s0, 4
      %s16 = int_to_ptr.hbm [resolvable:$true] %s15
      %s17 = sshll.u32 [#allocation2], 4
      %s18 = int_to_ptr.vmem [resolvable:$true] %s17
      %23 = dma.hbm_to_vmem [thread:$0]  %s16, 256, %s18, [#allocation3], 128, 128, 8
    $region5: #{tpu_custom_call.1} parent=1 // pred_fallthru
      _
    // Predicated region
    $region6: #{tpu_custom_call.1} parent=1 // pred_check
      _
    $region7: #{tpu_custom_call.1} parent=1 // pred_check_branch
      %25 = sbr.rel (0) target = $region9
    $region8: #{tpu_custom_call.1} parent=1 // pred_region
      %27 = vsyncadd [#allocation6], 0
      %s28 = sshll.u32 %s1, 4
      %s29 = int_to_ptr.hbm [resolvable:$true] %s28
      %s30 = sshll.u32 [#allocation5], 4
      %s31 = int_to_ptr.vmem [resolvable:$true] %s30
      %36 = dma.hbm_to_vmem [thread:$0]  %s29, 512, %s31, [#allocation6], 128, 128, 8
    $region9: #{tpu_custom_call.1} parent=1 // pred_fallthru
      _
    // Predicated region
    $region10: #{tpu_custom_call.1} parent=1 // pred_check
      _
    $region11: #{tpu_custom_call.1} parent=1 // pred_check_branch
      %38 = sbr.rel (0) target = $region13
    $region12: #{tpu_custom_call.1} parent=1 // pred_region
      _
    $region13: #{tpu_custom_call.1} parent=1 // pred_fallthru
      _
    // Predicated region
    $region14: #{tpu_custom_call.1} parent=1 // pred_check
      _
    $region15: #{tpu_custom_call.1} parent=1 // pred_check_branch
      %40 = sbr.rel (0) target = $region17
    $region16: #{tpu_custom_call.1} parent=1 // pred_region
      %42 = dma.done [#allocation3], 256
    $region17: #{tpu_custom_call.1} parent=1 // pred_fallthru
      _
    // Predicated region
    $region18: #{tpu_custom_call.1} parent=1 // pred_check
      _
    $region19: #{tpu_custom_call.1} parent=1 // pred_check_branch
      %44 = sbr.rel (0) target = $region21
    $region20: #{tpu_custom_call.1} parent=1 // pred_region
      %46 = dma.done [#allocation6], 512
    $region21: #{tpu_custom_call.1} parent=1 // pred_fallthru
      _
    %v47 = vld [vmem:[#allocation2] sm:$0xff]
    %v48 = vld [vmem:[#allocation2 + $0x8] sm:$0xff]
    %v49 = vld [vmem:[#allocation5] sm:$0xff]
    %v50 = vld [vmem:[#allocation5 + $0x8] sm:$0xff]
    %v51 = vld [vmem:[#allocation5 + $0x10] sm:$0xff]
    %v52 = vld [vmem:[#allocation5 + $0x18] sm:$0xff]
    %v53 = vld [vmem:[%s2] sm:$0x1]
    %v55 = vperm.slane %v53, 0
    %vm57 = vcmask 261120
    %v59 = vsel %vm57, %v47, 0
    %v62 = vsel %vm57, %v48, 0
    %64 = vmatpush.msra.mxu0 0.0
    %65 = vmatpush.msra.mxu0 0.0
    %66 = vmatpush.msra.mxu0 0.0
    %67 = vmatpush.msra.mxu0 0.0
    %68 = vmatpush.msra.mxu0 0.0
    %69 = vmatpush.msra.mxu0 0.0
    %70 = vmatpush.msra.mxu0 0.0
    %71 = vmatpush.msra.mxu0 0.0
    %72 = vmatpush.msra.mxu0 0.0
    %73 = vmatpush.msra.mxu0 0.0
    %74 = vmatpush.msra.mxu0 0.0
    %75 = vmatpush.msra.mxu0 0.0
    %76 = vmatpush.msra.mxu0 %v52
    %77 = vmatpush.msra.mxu0 %v51
    %78 = vmatpush.msra.mxu0 %v50
    %79 = vmatpush.msra.mxu0 %v49
    %80 = vmatmul.f32.gmra.mxu0 %v59
    %v81 = vpop.f32.mrf.mxu0
    %v82 = vadd.f32 %v55, %v81
    %83 = vmatmul.f32.gmra.mxu0 %v62
    %v84 = vpop.f32.mrf.mxu0
    %v85 = vadd.f32 %v55, %v84
    %86 = vdwg.mxu0
    %87 = vst.msk [vmem:[#allocation7] sm:$0xff] %vm57, %v82
    %88 = vst.msk [vmem:[#allocation7 + $0x8] sm:$0xff] %vm57, %v85
    // Predicated region
    $region22: #{tpu_custom_call.1} parent=1 // pred_check
      _
    $region23: #{tpu_custom_call.1} parent=1 // pred_check_branch
      %90 = sbr.rel (0) target = $region25
    $region24: #{tpu_custom_call.1} parent=1 // pred_region
      %92 = vsyncadd [#allocation4], 0
      %s93 = sshll.u32 [#allocation7], 4
      %s94 = int_to_ptr.vmem [resolvable:$true] %s93
      %s95 = sshll.u32 %s3, 4
      %s96 = int_to_ptr.hbm [resolvable:$true] %s95
      %101 = dma.vmem_to_hbm [thread:$0]  %s94, 256, %s96, [#allocation4], 128, 128, 8
    $region25: #{tpu_custom_call.1} parent=1 // pred_fallthru
      _
    // Predicated region
    $region26: #{tpu_custom_call.1} parent=1 // pred_check
      _
    $region27: #{tpu_custom_call.1} parent=1 // pred_check_branch
      %103 = sbr.rel (0) target = $region29
    $region28: #{tpu_custom_call.1} parent=1 // pred_region
      %105 = dma.done [#allocation4], 256
    $region29: #{tpu_custom_call.1} parent=1 // pred_fallthru
      _
    %106 = vsyncpa [#allocation3], 1
    %107 = vsyncpa [#allocation6], 1
    %108 = vsyncpa [#allocation4], 1

</llo_original>
